<compile_context>
chip_gen: v6e
topology: v6e:2x2x1
jax: 0.10.0
libtpu: 0.0.40
codegen_flags: <defaults>
</compile_context>

<pallas_src>
import jax
import jax.numpy as jnp
from jax.experimental import pallas as pl
from jax.experimental.pallas import tpu as pltpu


def _round_up(v, m):
    return ((v + m - 1) // m) * m


def _cdiv(a, b):
    return (a + b - 1) // b


def _vmem_budget_bytes():
    """Generation-aware usable-VMEM budget (headroom left for Mosaic)."""
    try:
        cap = int(pltpu.get_tpu_info().vmem_capacity_bytes)
    except Exception:  # interpret mode / unknown chip
        cap = 64 * 1024 * 1024
    if cap <= 64 * 1024 * 1024:          # v7x: 64 MiB per TensorCore
        return 40 * 1024 * 1024
    return 96 * 1024 * 1024              # v5e / v6e: 128 MiB


# -----------------------------------------------------------------------------
# Kernels
# -----------------------------------------------------------------------------

def _linear_fullk_kernel(x_ref, w_ref, b_ref, o_ref):
    # Full-K tile: single MXU dot per (i, j); bias added exactly once in f32.
    o_ref[...] = (
        jnp.dot(x_ref[...], w_ref[...], preferred_element_type=jnp.float32)
        + b_ref[...].astype(jnp.float32)
    ).astype(o_ref.dtype)


def _linear_ktiled_kernel(x_ref, w_ref, b_ref, o_ref, acc_ref):
    # Fallback for very large in_features: f32 accumulator resident across k.
    k = pl.program_id(2)

    @pl.when(k == 0)
    def _init():
        acc_ref[...] = jnp.zeros_like(acc_ref)

    acc_ref[...] += jnp.dot(
        x_ref[...], w_ref[...], preferred_element_type=jnp.float32
    )

    @pl.when(k == pl.num_programs(2) - 1)
    def _finalize():
        o_ref[...] = (
            acc_ref[...] + b_ref[...].astype(jnp.float32)
        ).astype(o_ref.dtype)


# -----------------------------------------------------------------------------
# Wrapper
# -----------------------------------------------------------------------------

def head_cls_forward(x, w_t, b, *, tm_max=256, tn_max=256):
    """Head_Cls.forward: qs(x) = x @ w_t + b.

    x   : (..., F)  activations, streamed in the caller's dtype (no wrapper
                    cast / pad passes over x).
    w_t : (F, O)    Linear weight, transposed from torch's (O, F) layout.
    b   : (O,) or (1, O)
    """
    lead_shape = x.shape[:-1]
    F = x.shape[-1]
    O = w_t.shape[1]
    assert w_t.shape[0] == F, "w_t must have shape (in_features, out_features)"

    x2 = x.reshape(-1, F)              # fold leading dims into the GEMM M dim
    B = x2.shape[0]
    b2 = jnp.reshape(b, (1, O))
    out_dtype = x.dtype

    in_isz = jnp.dtype(x2.dtype).itemsize
    w_isz = jnp.dtype(w_t.dtype).itemsize
    out_isz = jnp.dtype(out_dtype).itemsize
    # Sub-32-bit dtypes pack rows along sublanes: f32 -> 8, bf16 -> 16, int8 -> 32.
    sub = max(8, 32 // max(1, in_isz))

    budget = _vmem_budget_bytes()

    # ---- M (row) tiling: never pad x; ragged edge tiles are masked. ---------
    if B <= tm_max:
        tm = B                                   # block dim == full array dim
    else:
        nm = _cdiv(B, tm_max)                    # balance tiles to minimise
        tm = _round_up(_cdiv(B, nm), sub)        # redundant edge-row work

    # ---- N (column) tiling: never pad the small-O (default O=1) case. -------
    if O <= tn_max:
        tn = O                                   # full-dim block, thin store
    else:
        tn = tn_max                              # 256-wide fills v6e/v7x MXU

    # ---- Shrink tiles until the full-K strips fit the VMEM budget. ----------
    def fullk_bytes(tm_, tn_):
        return (2 * (tm_ * F * in_isz + F * tn_ * w_isz + tn_ * 4)
                + 2 * tm_ * tn_ * out_isz)

    while fullk_bytes(tm, tn) > budget and (tm > sub or tn > 128):
        if tm >= tn and tm > sub:
            tm = max(sub, _round_up(_cdiv(tm, 2), sub))
        elif tn > 128:
            tn = max(128, _round_up(_cdiv(tn, 2), 128))
        else:
            break

    grid_m = _cdiv(B, tm)
    grid_n = _cdiv(O, tn)

    # v7x shards 'parallel' grid axes across its two TensorCores: make sure at
    # least two (i, j) tiles exist (costs one ~0.35us extra step elsewhere).
    if grid_m * grid_n == 1 and B >= 2 * sub:
        tm = _round_up(_cdiv(B, 2), sub)
        grid_m = _cdiv(B, tm)

    use_fullk = fullk_bytes(tm, tn) <= budget

    if use_fullk:
        vmem_needed = fullk_bytes(tm, tn)
        vmem_limit = int(min(budget, max(2 * vmem_needed, 8 * 1024 * 1024)))
        cost = pl.CostEstimate(
            flops=2 * (grid_m * tm) * F * (grid_n * tn),
            transcendentals=0,
            bytes_accessed=(grid_m * tm * F * in_isz            # x: once per i
                            + grid_m * grid_n * F * tn * w_isz  # W per (i, j)
                            + grid_m * grid_n * tn * 4          # bias
                            + B * O * out_isz),                 # output
        )
        out2 = pl.pallas_call(
            _linear_fullk_kernel,
            out_shape=jax.ShapeDtypeStruct((B, O), out_dtype),
            grid_spec=pltpu.PrefetchScalarGridSpec(
                num_scalar_prefetch=0,
                grid=(grid_m, grid_n),
                in_specs=[
                    pl.BlockSpec((tm, F), lambda i, j: (i, 0)),
                    pl.BlockSpec((F, tn), lambda i, j: (0, j)),
                    pl.BlockSpec((1, tn), lambda i, j: (0, j)),
                ],
                out_specs=pl.BlockSpec((tm, tn), lambda i, j: (i, j)),
            ),
            compiler_params=pltpu.CompilerParams(
                dimension_semantics=("parallel", "parallel"),
                vmem_limit_bytes=vmem_limit,
            ),
            cost_estimate=cost,
        )(x2, w_t, b2)
    else:
        # K-tiled fallback (very large in_features): pad only K, only here.
        def ktiled_bytes(tm_, tn_, tk_):
            return (2 * (tm_ * tk_ * in_isz + tk_ * tn_ * w_isz + tn_ * 4)
                    + 2 * tm_ * tn_ * out_isz + tm_ * tn_ * 4)

        tk = 128
        while 2 * tk < F and ktiled_bytes(tm, tn, 2 * tk) <= budget:
            tk *= 2
        Fp = _round_up(F, tk)
        xk = x2 if Fp == F else jnp.pad(x2, ((0, 0), (0, Fp - F)))
        wk = w_t if Fp == F else jnp.pad(w_t, ((0, Fp - F), (0, 0)))
        grid_k = Fp // tk

        vmem_needed = ktiled_bytes(tm, tn, tk)
        vmem_limit = int(min(budget, max(2 * vmem_needed, 8 * 1024 * 1024)))
        cost = pl.CostEstimate(
            flops=2 * (grid_m * tm) * Fp * (grid_n * tn),
            transcendentals=0,
            bytes_accessed=(grid_m * tm * Fp * in_isz
                            + grid_m * grid_n * Fp * tn * w_isz
                            + grid_m * grid_n * tn * 4
                            + B * O * out_isz),
        )
        out2 = pl.pallas_call(
            _linear_ktiled_kernel,
            out_shape=jax.ShapeDtypeStruct((B, O), out_dtype),
            grid_spec=pltpu.PrefetchScalarGridSpec(
                num_scalar_prefetch=0,
                grid=(grid_m, grid_n, grid_k),
                in_specs=[
                    pl.BlockSpec((tm, tk), lambda i, j, k: (i, k)),
                    pl.BlockSpec((tk, tn), lambda i, j, k: (k, j)),
                    pl.BlockSpec((1, tn), lambda i, j, k: (0, j)),
                ],
                out_specs=pl.BlockSpec((tm, tn), lambda i, j, k: (i, j)),
                scratch_shapes=[pltpu.VMEM((tm, tn), jnp.float32)],
            ),
            compiler_params=pltpu.CompilerParams(
                dimension_semantics=("parallel", "parallel", "arbitrary"),
                vmem_limit_bytes=vmem_limit,
            ),
            cost_estimate=cost,
        )(xk, wk, b2)

    return out2.reshape(*lead_shape, O)


def init_head_cls_params(key, in_features, out_features):
    # Mimic torch.nn.Linear default init:
    # uniform in [-1/sqrt(in_features), 1/sqrt(in_features)].
    kw, kb = jax.random.split(key)
    bound = 1.0 / jnp.sqrt(jnp.float32(in_features))
    w = jax.random.uniform(kw, (out_features, in_features), jnp.float32,
                           minval=-bound, maxval=bound)
    b = jax.random.uniform(kb, (out_features,), jnp.float32,
                           minval=-bound, maxval=bound)
    return w, b


if __name__ == "__main__":
    key = jax.random.PRNGKey(0)
    k_x, k_p = jax.random.split(key)

    # Module defaults: in_features=1024, out_features=1.
    # Small leading dims (4, 8) fold into 32 GEMM rows.
    in_features, out_features = 1024, 1
    lead = (4, 8)

    x = jax.random.normal(k_x, (*lead, in_features), jnp.float32)
    w, b = init_head_cls_params(k_p, in_features, out_features)

    out = head_cls_forward(x, w.T, b)   # kernel takes the transposed weight
    out = jax.block_until_ready(out)

    # Reference check against plain JAX (same math as torch.nn.Linear).
    ref = x @ w.T + b
    assert out.shape == (*lead, out_features)
    assert jnp.allclose(out, ref, atol=1e-4, rtol=1e-4), float(
        jnp.max(jnp.abs(out - ref)))

    print("KERNEL_OK")
</pallas_src>

<mosaic_0001>
module attributes {stable_mosaic.version = 11 : i64} {
  func.func @_linear_fullk_kernel(%arg0: i32, %arg1: i32, %arg2: memref<16x1024xf32, #tpu.memory_space<vmem>>, %arg3: memref<1024x1xf32, #tpu.memory_space<vmem>>, %arg4: memref<1x1xf32, #tpu.memory_space<vmem>>, %arg5: memref<16x1xf32, #tpu.memory_space<vmem>>) attributes {dimension_semantics = [#tpu.dimension_semantics<parallel>, #tpu.dimension_semantics<parallel>], iteration_bounds = array<i64: 2, 1>, scalar_prefetch = 0 : i64, scratch_operands = 0 : i64, tpu.core_type = #tpu.core_type<tc>, window_params = [{transform_indices = @transform_0, window_bounds = array<i64: 16, 1024>}, {transform_indices = @transform_1, window_bounds = array<i64: 1024, 1>}, {transform_indices = @transform_2, window_bounds = array<i64: 1, 1>}, {transform_indices = @transform_3, window_bounds = array<i64: 16, 1>}]} {
    %c0 = arith.constant 0 : index
    %c0_0 = arith.constant 0 : index
    %0 = vector.load %arg2[%c0, %c0_0] : memref<16x1024xf32, #tpu.memory_space<vmem>>, vector<16x1024xf32>
    %c0_1 = arith.constant 0 : index
    %c0_2 = arith.constant 0 : index
    %1 = vector.load %arg3[%c0_1, %c0_2] : memref<1024x1xf32, #tpu.memory_space<vmem>>, vector<1024x1xf32>
    %cst = arith.constant dense<0.000000e+00> : vector<16x1xf32>
    %2 = tpu.matmul %0, %1, %cst {dimension_numbers = #tpu.dot_dimension_numbers<[1], [0], [0], [1], [0, 0, 1, 1], [], []>} : vector<16x1024xf32>, vector<1024x1xf32>, vector<16x1xf32> -> vector<16x1xf32>
    %c0_3 = arith.constant 0 : index
    %c0_4 = arith.constant 0 : index
    %3 = vector.load %arg4[%c0_3, %c0_4] : memref<1x1xf32, #tpu.memory_space<vmem>>, vector<1x1xf32>
    %4 = vector.broadcast %3 : vector<1x1xf32> to vector<16x1xf32>
    %5 = arith.addf %2, %4 : vector<16x1xf32>
    %c0_5 = arith.constant 0 : index
    %c0_6 = arith.constant 0 : index
    %6 = vector.load %arg5[%c0_5, %c0_6] : memref<16x1xf32, #tpu.memory_space<vmem>>, vector<16x1xf32>
    tpu.vector_store %arg5[%c0_5, %c0_6], %5 {strides = array<i32>} : memref<16x1xf32, #tpu.memory_space<vmem>>, vector<16x1xf32>,
    return
  }
  func.func @transform_0(%arg0: i32, %arg1: i32) -> (i32, i32) {
    %c0_i32 = arith.constant 0 : i32
    %c0_i32_0 = arith.constant 0 : i32
    return %arg0, %c0_i32 : i32, i32
  }
  func.func @transform_1(%arg0: i32, %arg1: i32) -> (i32, i32) {
    %c0_i32 = arith.constant 0 : i32
    %c0_i32_0 = arith.constant 0 : i32
    return %c0_i32, %arg1 : i32, i32
  }
  func.func @transform_2(%arg0: i32, %arg1: i32) -> (i32, i32) {
    %c0_i32 = arith.constant 0 : i32
    %c0_i32_0 = arith.constant 0 : i32
    return %c0_i32, %arg1 : i32, i32
  }
  func.func @transform_3(%arg0: i32, %arg1: i32) -> (i32, i32) {
    %c0_i32 = arith.constant 0 : i32
    return %arg0, %arg1 : i32, i32
  }
}

</mosaic_0001>

<llo_original>
// kernel: tpu_custom_call.1
$region0: #{tpu_custom_call.1}
  #allocation0 [shape = 'u32[]', space=smem, size = 0x4, offset = 0x4, fixed_abs, tag = 'smem constant byte address 0x4 - core index']
  #allocation1 [shape = 'u32[144,128]{1,0:T(1,128)}', space=vmem, size = 0x12000, scoped, tag = 'internal scratch']
  #allocation2 [shape = 'f32[1,1]{1,0:T(1,128)S(1)}', space=vmem, size = 0x200, scoped, tag = 'scoped memory for tpu_custom_call.1']
  %s0 = inlined_call_operand.vmem [shape: f32[32,1024], index: 0, kind: input, shape index: {}]
  %s1 = inlined_call_operand.vmem [shape: f32[1024,1], index: 1, kind: input, shape index: {}]
  %s2 = inlined_call_operand.<no memory space> [shape: f32[1,1], index: 2, kind: input, shape index: {}]
  %s3 = inlined_call_operand.vmem [shape: f32[32,1], index: 3, kind: output, shape index: {}]
  %s4 = sld [smem:[#allocation0]]
  $region45: #{tpu_custom_call.1} parent=0
    _
  %s6 = ssub.s32 1, %s4
  %s7 = scalar_select 0, %s6, %s4
  %v8 = vstv %s2
  %9 = vst [vmem:[#allocation2] sm:$0x1] %v8
  loop: start=0, step=1, limit=4
  $region2: #{tpu_custom_call.1} parent=0 // loop_pre_header
    _
  $region3: #{tpu_custom_call.1} parent=0 // loop_header
    %s11 = sphi 0, %s15
    %p12 = scmp.ge.s32.totalorder %s11, 4
    %s18 = sphi 0, %s30
    %s19 = sphi 0, %s26
    %s20 = sphi 0, %s18
    %s21 = sphi 0, %s19
    %s22 = sphi 0, %s20
    %s23 = sphi 0, %s21
    %s33 = sphi 0, %s35
    %s36 = sphi 0, %s33
    %s37 = sphi 0, %s36
    %s53 = sphi 0, %s37
    %s59 = sphi 0, %s61
    %s62 = sphi 0, %s59
    %s63 = sphi 0, %s62
    %s79 = sphi 0, %s63
    %s85 = sphi 0, %s87
    %s88 = sphi 0, %s85
    %s89 = sphi 0, %s88
    %s105 = sphi 0, %s89
    %s113 = sphi 0, %s115
    %s116 = sphi 0, %s113
    %s117 = sphi 0, %s116
    %s133 = sphi 0, %s117
  $region4: #{tpu_custom_call.1} parent=0 // loop_header_branch
    %14 = sbr.rel (%p12) target = $region8
  $region5: #{tpu_custom_call.1} parent=0 // loop_body
    %s16 = ssub.s32 %s11, 1
    %s17 = ssub.s32 %s11, 2
    %s24 = sadd.s32 1, %s19
    %p25 = scmp.ge.s32.totalorder %s24, 1
    %s26 = scalar_select %p25, 0, %s24
    %s27 = sadd.s32 1, %s18
    %s28 = scalar_select %p25, %s27, %s18
    %p29 = scmp.ge.s32.totalorder %s28, 2
    %s30 = scalar_select %p29, 0, %s28
    %s31 = ssub.s32 %s18, %s30
    %p32 = scmp.eq.s32.totalorder %s31, 0
    %s34 = sadd.s32 %s33, 1
    %s35 = scalar_select %p32, %s33, %s34
    %p38 = pneg %p32
    %p39 = scmp.eq.s32.totalorder %s11, 1
    %p40 = por %p38, %p39
    %p41 = scmp.ne.s32.totalorder %s33, %s36
    %p42 = scmp.eq.s32.totalorder %s11, 0
    %p43 = por %p41, %p42
    %p44 = scmp.ne.s32.totalorder %s33, %s36
    %p45 = scmp.eq.s32.totalorder %s16, 1
    %p46 = por %p44, %p45
    %p47 = scmp.ne.s32.totalorder %s36, %s37
    %p48 = scmp.eq.s32.totalorder %s16, 0
    %p49 = por %p47, %p48
    %p50 = scmp.ne.s32.totalorder %s36, %s37
    %p51 = scmp.eq.s32.totalorder %s17, 1
    %p52 = por %p50, %p51
    %p54 = scmp.ne.s32.totalorder %s37, %s53
    %p55 = scmp.eq.s32.totalorder %s17, 0
    %p56 = por %p54, %p55
    %s57 = ssub.s32 %s19, %s26
    %p58 = scmp.eq.s32.totalorder %s57, 0
    %s60 = sadd.s32 %s59, 1
    %s61 = scalar_select %p58, %s59, %s60
    %p64 = pneg %p58
    %p65 = scmp.eq.s32.totalorder %s11, 1
    %p66 = por %p64, %p65
    %p67 = scmp.ne.s32.totalorder %s59, %s62
    %p68 = scmp.eq.s32.totalorder %s11, 0
    %p69 = por %p67, %p68
    %p70 = scmp.ne.s32.totalorder %s59, %s62
    %p71 = scmp.eq.s32.totalorder %s16, 1
    %p72 = por %p70, %p71
    %p73 = scmp.ne.s32.totalorder %s62, %s63
    %p74 = scmp.eq.s32.totalorder %s16, 0
    %p75 = por %p73, %p74
    %p76 = scmp.ne.s32.totalorder %s62, %s63
    %p77 = scmp.eq.s32.totalorder %s17, 1
    %p78 = por %p76, %p77
    %p80 = scmp.ne.s32.totalorder %s63, %s79
    %p81 = scmp.eq.s32.totalorder %s17, 0
    %p82 = por %p80, %p81
    %s83 = ssub.s32 %s19, %s26
    %p84 = scmp.eq.s32.totalorder %s83, 0
    %s86 = sadd.s32 %s85, 1
    %s87 = scalar_select %p84, %s85, %s86
    %p90 = pneg %p84
    %p91 = scmp.eq.s32.totalorder %s11, 1
    %p92 = por %p90, %p91
    %p93 = scmp.ne.s32.totalorder %s85, %s88
    %p94 = scmp.eq.s32.totalorder %s11, 0
    %p95 = por %p93, %p94
    %p96 = scmp.ne.s32.totalorder %s85, %s88
    %p97 = scmp.eq.s32.totalorder %s16, 1
    %p98 = por %p96, %p97
    %p99 = scmp.ne.s32.totalorder %s88, %s89
    %p100 = scmp.eq.s32.totalorder %s16, 0
    %p101 = por %p99, %p100
    %p102 = scmp.ne.s32.totalorder %s88, %s89
    %p103 = scmp.eq.s32.totalorder %s17, 1
    %p104 = por %p102, %p103
    %p106 = scmp.ne.s32.totalorder %s89, %s105
    %p107 = scmp.eq.s32.totalorder %s17, 0
    %p108 = por %p106, %p107
    %s109 = ssub.s32 %s18, %s30
    %s110 = ssub.s32 %s19, %s26
    %s111 = sor.u32 %s109, %s110
    %p112 = scmp.eq.s32.totalorder %s111, 0
    %s114 = sadd.s32 %s113, 1
    %s115 = scalar_select %p112, %s113, %s114
    %p118 = pneg %p112
    %p119 = scmp.eq.s32.totalorder %s11, 1
    %p120 = por %p118, %p119
    %p121 = scmp.ne.s32.totalorder %s113, %s116
    %p122 = scmp.eq.s32.totalorder %s11, 0
    %p123 = por %p121, %p122
    %p124 = scmp.ne.s32.totalorder %s113, %s116
    %p125 = scmp.eq.s32.totalorder %s16, 1
    %p126 = por %p124, %p125
    %p127 = scmp.ne.s32.totalorder %s116, %s117
    %p128 = scmp.eq.s32.totalorder %s16, 0
    %p129 = por %p127, %p128
    %p130 = scmp.ne.s32.totalorder %s116, %s117
    %p131 = scmp.eq.s32.totalorder %s17, 1
    %p132 = por %p130, %p131
    %p134 = scmp.ne.s32.totalorder %s117, %s133
    %p135 = scmp.eq.s32.totalorder %s17, 0
    %p136 = por %p134, %p135
    %p137 = scmp.le.s32.totalorder 1, %s11
    %p138 = scmp.lt.s32.totalorder %s11, 3
    %p139 = pnand %p137, %p138
    %p140 = pneg %p139
    // Predicated region
    $region9: #{tpu_custom_call.1} parent=5 // pred_check
      _
    $region10: #{tpu_custom_call.1} parent=5 // pred_check_branch
      %142 = sbr.rel (%p139) target = $region12
    $region11: #{tpu_custom_call.1} parent=5 // pred_region
      %s143 = ssub.s32 %s11, 1
      // Predicated region
      $region13: #{tpu_custom_call.1} parent=11 // pred_check
        %p144 = pneg %p75
      $region14: #{tpu_custom_call.1} parent=11 // pred_check_branch
        %146 = sbr.rel (%p144) target = $region16
      $region15: #{tpu_custom_call.1} parent=11 // pred_region
        %p147 = scmp.lt.s32.totalorder %s21, 0
        %s148 = scalar_select %p147, %s21, 0
        %s149 = smul.addr %s148, 8
        %s150 = scalar_lea.vmem %s1, %s149
      $region16: #{tpu_custom_call.1} parent=11 // pred_fallthru
        _
      // Predicated region
      $region17: #{tpu_custom_call.1} parent=11 // pred_check
        %p151 = pneg %p101
      $region18: #{tpu_custom_call.1} parent=11 // pred_check_branch
        %153 = sbr.rel (%p151) target = $region20
      $region19: #{tpu_custom_call.1} parent=11 // pred_region
        %p154 = scmp.lt.s32.totalorder %s21, 0
        %s155 = scalar_select %p154, %s21, 0
        %s156 = scalar_lea.vmem [#allocation2], %s155
      $region20: #{tpu_custom_call.1} parent=11 // pred_fallthru
        _
    $region12: #{tpu_custom_call.1} parent=5 // pred_fallthru
      _
    %p157 = scmp.lt.s32.totalorder %s11, 2
    // Predicated region
    $region21: #{tpu_custom_call.1} parent=5 // pred_check
      %p158 = pneg %p157
    $region22: #{tpu_custom_call.1} parent=5 // pred_check_branch
      %160 = sbr.rel (%p158) target = $region24
    $region23: #{tpu_custom_call.1} parent=5 // pred_region
      // Predicated region
      $region25: #{tpu_custom_call.1} parent=23 // pred_check
        %p161 = pneg %p43
      $region26: #{tpu_custom_call.1} parent=23 // pred_check_branch
        %163 = sbr.rel (%p161) target = $region28
      $region27: #{tpu_custom_call.1} parent=23 // pred_region
        %s164 = smul.u32 2, %s18
        %p165 = scmp.lt.s32.totalorder %s164, 3
        %s166 = scalar_select %p165, %s164, 3
        %s167 = smul.addr %s166, 8
        %s168 = smul.addr %s167, 8
        %s169 = scalar_lea.vmem %s0, %s168
        %s170 = smul.u32 2, %s18
      $region28: #{tpu_custom_call.1} parent=23 // pred_fallthru
        _
    $region24: #{tpu_custom_call.1} parent=5 // pred_fallthru
      _
    %p171 = scmp.le.s32.totalorder 1, %s11
    %p172 = scmp.lt.s32.totalorder %s11, 3
    %p173 = pnand %p171, %p172
    %p174 = pneg %p173
    // Predicated region
    $region29: #{tpu_custom_call.1} parent=5 // pred_check
      _
    $region30: #{tpu_custom_call.1} parent=5 // pred_check_branch
      %176 = sbr.rel (%p173) target = $region32
    $region31: #{tpu_custom_call.1} parent=5 // pred_region
      %s177 = ssub.s32 %s11, 1
      %s178 = smul.u32 2, %s20
      %p179 = scmp.lt.s32.totalorder %s178, 3
      %s180 = scalar_select %p179, %s178, 3
      %s181 = smul.addr %s180, 8
      %s182 = smul.addr %s181, 8
      %s183 = scalar_lea.vmem %s0, %s182
      %p184 = pneg %p49
      %p185 = pneg %p46
      %p186 = scmp.lt.s32.totalorder %s21, 0
      %s187 = scalar_select %p186, %s21, 0
      %s188 = smul.addr %s187, 8
      %s189 = scalar_lea.vmem %s1, %s188
      %p190 = pneg %p75
      %p191 = pneg %p72
      %p192 = scmp.lt.s32.totalorder %s21, 0
      %s193 = scalar_select %p192, %s21, 0
      %s194 = scalar_lea.vmem [#allocation2], %s193
      %p195 = pneg %p101
      %p196 = pneg %p98
      %p197 = pneg %p129
      %p198 = pneg %p126
      %s199 = smul.u32 2, %s20
      %p200 = scmp.lt.s32.totalorder %s199, 3
      %s201 = scalar_select %p200, %s199, 3
      %p202 = scmp.lt.s32.totalorder %s21, 0
      %s203 = scalar_select %p202, %s21, 0
      %s204 = sadd.s32 %s203, %s201
      %s205 = smul.addr %s204, 8
      %s206 = scalar_lea.vmem %s3, %s205
      %s207 = smul.u32 2, %s20
      %p208 = scmp.lt.s32.totalorder %s207, 3
      %s209 = scalar_select %p208, %s207, 3
      %s210 = smul.addr %s209, 8
      %s211 = smul.addr %s210, 8
      %s212 = scalar_lea.vmem %s0, %s211
      %s213 = smul.u32 2, %s20
      %p214 = scmp.lt.s32.totalorder %s21, 0
      %s215 = scalar_select %p214, %s21, 0
      %s216 = smul.addr %s215, 8
      %s217 = scalar_lea.vmem %s1, %s216
      %p218 = scmp.lt.s32.totalorder %s21, 0
      %s219 = scalar_select %p218, %s21, 0
      %s220 = scalar_lea.vmem [#allocation2], %s219
      %s221 = smul.u32 2, %s20
      %p222 = scmp.lt.s32.totalorder %s221, 3
      %s223 = scalar_select %p222, %s221, 3
      %p224 = scmp.lt.s32.totalorder %s21, 0
      %s225 = scalar_select %p224, %s21, 0
      %s226 = sadd.s32 %s225, %s223
      %s227 = smul.addr %s226, 8
      %s228 = scalar_lea.vmem %s3, %s227
      %s229 = smul.u32 2, %s20
      %v230 = vld [vmem:[%s212] sm:$0xff]
      %v231 = vld [vmem:[%s212 + $0x8] sm:$0xff]
      %v232 = vld [vmem:[%s212 + $0x10] sm:$0xff]
      %v233 = vld [vmem:[%s212 + $0x18] sm:$0xff]
      %v234 = vld [vmem:[%s212 + $0x20] sm:$0xff]
      %v235 = vld [vmem:[%s212 + $0x28] sm:$0xff]
      %v236 = vld [vmem:[%s212 + $0x30] sm:$0xff]
      %v237 = vld [vmem:[%s212 + $0x38] sm:$0xff]
      %v238 = vld [vmem:[%s212 + $0x40] sm:$0xff]
      %v239 = vld [vmem:[%s212 + $0x48] sm:$0xff]
      %v240 = vld [vmem:[%s212 + $0x50] sm:$0xff]
      %v241 = vld [vmem:[%s212 + $0x58] sm:$0xff]
      %v242 = vld [vmem:[%s212 + $0x60] sm:$0xff]
      %v243 = vld [vmem:[%s212 + $0x68] sm:$0xff]
      %v244 = vld [vmem:[%s212 + $0x70] sm:$0xff]
      %v245 = vld [vmem:[%s212 + $0x78] sm:$0xff]
      %v246 = vld [vmem:[%s217] sm:$0xff]
      %v247 = vld [vmem:[%s217 + $0x8] sm:$0xff]
      %v248 = vld [vmem:[%s217 + $0x10] sm:$0xff]
      %v249 = vld [vmem:[%s217 + $0x18] sm:$0xff]
      %v250 = vld [vmem:[%s217 + $0x20] sm:$0xff]
      %v251 = vld [vmem:[%s217 + $0x28] sm:$0xff]
      %v252 = vld [vmem:[%s217 + $0x30] sm:$0xff]
      %v253 = vld [vmem:[%s217 + $0x38] sm:$0xff]
      %v254 = vld [vmem:[%s217 + $0x40] sm:$0xff]
      %v255 = vld [vmem:[%s217 + $0x48] sm:$0xff]
      %v256 = vld [vmem:[%s217 + $0x50] sm:$0xff]
      %v257 = vld [vmem:[%s217 + $0x58] sm:$0xff]
      %v258 = vld [vmem:[%s217 + $0x60] sm:$0xff]
      %v259 = vld [vmem:[%s217 + $0x68] sm:$0xff]
      %v260 = vld [vmem:[%s217 + $0x70] sm:$0xff]
      %v261 = vld [vmem:[%s217 + $0x78] sm:$0xff]
      %v262 = vld [vmem:[%s217 + $0x80] sm:$0xff]
      %v263 = vld [vmem:[%s217 + $0x88] sm:$0xff]
      %v264 = vld [vmem:[%s217 + $0x90] sm:$0xff]
      %v265 = vld [vmem:[%s217 + $0x98] sm:$0xff]
      %v266 = vld [vmem:[%s217 + $0xa0] sm:$0xff]
      %v267 = vld [vmem:[%s217 + $0xa8] sm:$0xff]
      %v268 = vld [vmem:[%s217 + $0xb0] sm:$0xff]
      %v269 = vld [vmem:[%s217 + $0xb8] sm:$0xff]
      %v270 = vld [vmem:[%s217 + $0xc0] sm:$0xff]
      %v271 = vld [vmem:[%s217 + $0xc8] sm:$0xff]
      %v272 = vld [vmem:[%s217 + $0xd0] sm:$0xff]
      %v273 = vld [vmem:[%s217 + $0xd8] sm:$0xff]
      %v274 = vld [vmem:[%s217 + $0xe0] sm:$0xff]
      %v275 = vld [vmem:[%s217 + $0xe8] sm:$0xff]
      %v276 = vld [vmem:[%s217 + $0xf0] sm:$0xff]
      %v277 = vld [vmem:[%s217 + $0xf8] sm:$0xff]
      %v278 = vld [vmem:[%s217 + $0x100] sm:$0xff]
      %v279 = vld [vmem:[%s217 + $0x108] sm:$0xff]
      %v280 = vld [vmem:[%s217 + $0x110] sm:$0xff]
      %v281 = vld [vmem:[%s217 + $0x118] sm:$0xff]
      %v282 = vld [vmem:[%s217 + $0x120] sm:$0xff]
      %v283 = vld [vmem:[%s217 + $0x128] sm:$0xff]
      %v284 = vld [vmem:[%s217 + $0x130] sm:$0xff]
      %v285 = vld [vmem:[%s217 + $0x138] sm:$0xff]
      %v286 = vld [vmem:[%s217 + $0x140] sm:$0xff]
      %v287 = vld [vmem:[%s217 + $0x148] sm:$0xff]
      %v288 = vld [vmem:[%s217 + $0x150] sm:$0xff]
      %v289 = vld [vmem:[%s217 + $0x158] sm:$0xff]
      %v290 = vld [vmem:[%s217 + $0x160] sm:$0xff]
      %v291 = vld [vmem:[%s217 + $0x168] sm:$0xff]
      %v292 = vld [vmem:[%s217 + $0x170] sm:$0xff]
      %v293 = vld [vmem:[%s217 + $0x178] sm:$0xff]
      %v294 = vld [vmem:[%s217 + $0x180] sm:$0xff]
      %v295 = vld [vmem:[%s217 + $0x188] sm:$0xff]
      %v296 = vld [vmem:[%s217 + $0x190] sm:$0xff]
      %v297 = vld [vmem:[%s217 + $0x198] sm:$0xff]
      %v298 = vld [vmem:[%s217 + $0x1a0] sm:$0xff]
      %v299 = vld [vmem:[%s217 + $0x1a8] sm:$0xff]
      %v300 = vld [vmem:[%s217 + $0x1b0] sm:$0xff]
      %v301 = vld [vmem:[%s217 + $0x1b8] sm:$0xff]
      %v302 = vld [vmem:[%s217 + $0x1c0] sm:$0xff]
      %v303 = vld [vmem:[%s217 + $0x1c8] sm:$0xff]
      %v304 = vld [vmem:[%s217 + $0x1d0] sm:$0xff]
      %v305 = vld [vmem:[%s217 + $0x1d8] sm:$0xff]
      %v306 = vld [vmem:[%s217 + $0x1e0] sm:$0xff]
      %v307 = vld [vmem:[%s217 + $0x1e8] sm:$0xff]
      %v308 = vld [vmem:[%s217 + $0x1f0] sm:$0xff]
      %v309 = vld [vmem:[%s217 + $0x1f8] sm:$0xff]
      %v310 = vld [vmem:[%s217 + $0x200] sm:$0xff]
      %v311 = vld [vmem:[%s217 + $0x208] sm:$0xff]
      %v312 = vld [vmem:[%s217 + $0x210] sm:$0xff]
      %v313 = vld [vmem:[%s217 + $0x218] sm:$0xff]
      %v314 = vld [vmem:[%s217 + $0x220] sm:$0xff]
      %v315 = vld [vmem:[%s217 + $0x228] sm:$0xff]
      %v316 = vld [vmem:[%s217 + $0x230] sm:$0xff]
      %v317 = vld [vmem:[%s217 + $0x238] sm:$0xff]
      %v318 = vld [vmem:[%s217 + $0x240] sm:$0xff]
      %v319 = vld [vmem:[%s217 + $0x248] sm:$0xff]
      %v320 = vld [vmem:[%s217 + $0x250] sm:$0xff]
      %v321 = vld [vmem:[%s217 + $0x258] sm:$0xff]
      %v322 = vld [vmem:[%s217 + $0x260] sm:$0xff]
      %v323 = vld [vmem:[%s217 + $0x268] sm:$0xff]
      %v324 = vld [vmem:[%s217 + $0x270] sm:$0xff]
      %v325 = vld [vmem:[%s217 + $0x278] sm:$0xff]
      %v326 = vld [vmem:[%s217 + $0x280] sm:$0xff]
      %v327 = vld [vmem:[%s217 + $0x288] sm:$0xff]
      %v328 = vld [vmem:[%s217 + $0x290] sm:$0xff]
      %v329 = vld [vmem:[%s217 + $0x298] sm:$0xff]
      %v330 = vld [vmem:[%s217 + $0x2a0] sm:$0xff]
      %v331 = vld [vmem:[%s217 + $0x2a8] sm:$0xff]
      %v332 = vld [vmem:[%s217 + $0x2b0] sm:$0xff]
      %v333 = vld [vmem:[%s217 + $0x2b8] sm:$0xff]
      %v334 = vld [vmem:[%s217 + $0x2c0] sm:$0xff]
      %v335 = vld [vmem:[%s217 + $0x2c8] sm:$0xff]
      %v336 = vld [vmem:[%s217 + $0x2d0] sm:$0xff]
      %v337 = vld [vmem:[%s217 + $0x2d8] sm:$0xff]
      %v338 = vld [vmem:[%s217 + $0x2e0] sm:$0xff]
      %v339 = vld [vmem:[%s217 + $0x2e8] sm:$0xff]
      %v340 = vld [vmem:[%s217 + $0x2f0] sm:$0xff]
      %v341 = vld [vmem:[%s217 + $0x2f8] sm:$0xff]
      %v342 = vld [vmem:[%s217 + $0x300] sm:$0xff]
      %v343 = vld [vmem:[%s217 + $0x308] sm:$0xff]
      %v344 = vld [vmem:[%s217 + $0x310] sm:$0xff]
      %v345 = vld [vmem:[%s217 + $0x318] sm:$0xff]
      %v346 = vld [vmem:[%s217 + $0x320] sm:$0xff]
      %v347 = vld [vmem:[%s217 + $0x328] sm:$0xff]
      %v348 = vld [vmem:[%s217 + $0x330] sm:$0xff]
      %v349 = vld [vmem:[%s217 + $0x338] sm:$0xff]
      %v350 = vld [vmem:[%s217 + $0x340] sm:$0xff]
      %v351 = vld [vmem:[%s217 + $0x348] sm:$0xff]
      %v352 = vld [vmem:[%s217 + $0x350] sm:$0xff]
      %v353 = vld [vmem:[%s217 + $0x358] sm:$0xff]
      %v354 = vld [vmem:[%s217 + $0x360] sm:$0xff]
      %v355 = vld [vmem:[%s217 + $0x368] sm:$0xff]
      %v356 = vld [vmem:[%s217 + $0x370] sm:$0xff]
      %v357 = vld [vmem:[%s217 + $0x378] sm:$0xff]
      %v358 = vld [vmem:[%s217 + $0x380] sm:$0xff]
      %v359 = vld [vmem:[%s217 + $0x388] sm:$0xff]
      %v360 = vld [vmem:[%s217 + $0x390] sm:$0xff]
      %v361 = vld [vmem:[%s217 + $0x398] sm:$0xff]
      %v362 = vld [vmem:[%s217 + $0x3a0] sm:$0xff]
      %v363 = vld [vmem:[%s217 + $0x3a8] sm:$0xff]
      %v364 = vld [vmem:[%s217 + $0x3b0] sm:$0xff]
      %v365 = vld [vmem:[%s217 + $0x3b8] sm:$0xff]
      %v366 = vld [vmem:[%s217 + $0x3c0] sm:$0xff]
      %v367 = vld [vmem:[%s217 + $0x3c8] sm:$0xff]
      %v368 = vld [vmem:[%s217 + $0x3d0] sm:$0xff]
      %v369 = vld [vmem:[%s217 + $0x3d8] sm:$0xff]
      %v370 = vld [vmem:[%s217 + $0x3e0] sm:$0xff]
      %v371 = vld [vmem:[%s217 + $0x3e8] sm:$0xff]
      %v372 = vld [vmem:[%s217 + $0x3f0] sm:$0xff]
      %v373 = vld [vmem:[%s217 + $0x3f8] sm:$0xff]
      %v374 = vld [vmem:[%s220] sm:$0x1]
      %v376 = vlaneseq
      %v377 = vshrl.u32 %v376, 7
      %v378 = vsub.s32 0, %v377
      %v379 = vrot.slane %v374, %v378
      %381 = vmatprep.subr.mxu0 0.0
      %382 = vmatpush1.msra.mxu0 %v261
      %383 = vmatprep.subr.mxu0 0.0
      %384 = vmatpush1.msra.mxu0 %v260
      %385 = vmatprep.subr.mxu0 0.0
      %386 = vmatpush1.msra.mxu0 %v259
      %387 = vmatprep.subr.mxu0 0.0
      %388 = vmatpush1.msra.mxu0 %v258
      %389 = vmatprep.subr.mxu0 0.0
      %390 = vmatpush1.msra.mxu0 %v257
      %391 = vmatprep.subr.mxu0 0.0
      %392 = vmatpush1.msra.mxu0 %v256
      %393 = vmatprep.subr.mxu0 0.0
      %394 = vmatpush1.msra.mxu0 %v255
      %395 = vmatprep.subr.mxu0 0.0
      %396 = vmatpush1.msra.mxu0 %v254
      %397 = vmatprep.subr.mxu0 0.0
      %398 = vmatpush1.msra.mxu0 %v253
      %399 = vmatprep.subr.mxu0 0.0
      %400 = vmatpush1.msra.mxu0 %v252
      %401 = vmatprep.subr.mxu0 0.0
      %402 = vmatpush1.msra.mxu0 %v251
      %403 = vmatprep.subr.mxu0 0.0
      %404 = vmatpush1.msra.mxu0 %v250
      %405 = vmatprep.subr.mxu0 0.0
      %406 = vmatpush1.msra.mxu0 %v249
      %407 = vmatprep.subr.mxu0 0.0
      %408 = vmatpush1.msra.mxu0 %v248
      %409 = vmatprep.subr.mxu0 0.0
      %410 = vmatpush1.msra.mxu0 %v247
      %411 = vmatprep.subr.mxu0 0.0
      %412 = vmatpush1.msra.mxu0 %v246
      %413 = vmatprep.subr.mxu0 0.0
      %414 = vmatpush2.msra.mxu0 %v277
      %415 = vmatprep.subr.mxu0 0.0
      %416 = vmatpush2.msra.mxu0 %v276
      %417 = vmatprep.subr.mxu0 0.0
      %418 = vmatpush2.msra.mxu0 %v275
      %419 = vmatprep.subr.mxu0 0.0
      %420 = vmatpush2.msra.mxu0 %v274
      %421 = vmatprep.subr.mxu0 0.0
      %422 = vmatpush2.msra.mxu0 %v273
      %423 = vmatprep.subr.mxu0 0.0
      %424 = vmatpush2.msra.mxu0 %v272
      %425 = vmatprep.subr.mxu0 0.0
      %426 = vmatpush2.msra.mxu0 %v271
      %427 = vmatprep.subr.mxu0 0.0
      %428 = vmatpush2.msra.mxu0 %v270
      %429 = vmatprep.subr.mxu0 0.0
      %430 = vmatpush2.msra.mxu0 %v269
      %431 = vmatprep.subr.mxu0 0.0
      %432 = vmatpush2.msra.mxu0 %v268
      %433 = vmatprep.subr.mxu0 0.0
      %434 = vmatpush2.msra.mxu0 %v267
      %435 = vmatprep.subr.mxu0 0.0
      %436 = vmatpush2.msra.mxu0 %v266
      %437 = vmatprep.subr.mxu0 0.0
      %438 = vmatpush2.msra.mxu0 %v265
      %439 = vmatprep.subr.mxu0 0.0
      %440 = vmatpush2.msra.mxu0 %v264
      %441 = vmatprep.subr.mxu0 0.0
      %442 = vmatpush2.msra.mxu0 %v263
      %443 = vmatprep.subr.mxu0 0.0
      %444 = vmatpush2.msra.mxu0 %v262
      %445 = vmatprep.mubr.f32.mxu0 %v231
      %446 = vmatmul.mubr.f32.gmra.mxu0 %v230
      %v447 = vpop.f32.mrf.mxu0
      %v448 = vadd.f32 %v379, %v447
      %v449 = vpop.f32.mrf.mxu0
      %450 = vmatprep.mubr.f32.mxu0 %v239
      %451 = vmatmul.mubr.f32.gmra.mxu0 %v238
      %v452 = vpop.f32.mrf.mxu0
      %v453 = vadd.f32 %v379, %v452
      %v454 = vpop.f32.mrf.mxu0
      %455 = vdwg.mxu0
      %456 = vmatprep.subr.mxu0 0.0
      %457 = vmatpush1.msra.mxu0 %v293
      %458 = vmatprep.subr.mxu0 0.0
      %459 = vmatpush1.msra.mxu0 %v292
      %460 = vmatprep.subr.mxu0 0.0
      %461 = vmatpush1.msra.mxu0 %v291
      %462 = vmatprep.subr.mxu0 0.0
      %463 = vmatpush1.msra.mxu0 %v290
      %464 = vmatprep.subr.mxu0 0.0
      %465 = vmatpush1.msra.mxu0 %v289
      %466 = vmatprep.subr.mxu0 0.0
      %467 = vmatpush1.msra.mxu0 %v288
      %468 = vmatprep.subr.mxu0 0.0
      %469 = vmatpush1.msra.mxu0 %v287
      %470 = vmatprep.subr.mxu0 0.0
      %471 = vmatpush1.msra.mxu0 %v286
      %472 = vmatprep.subr.mxu0 0.0
      %473 = vmatpush1.msra.mxu0 %v285
      %474 = vmatprep.subr.mxu0 0.0
      %475 = vmatpush1.msra.mxu0 %v284
      %476 = vmatprep.subr.mxu0 0.0
      %477 = vmatpush1.msra.mxu0 %v283
      %478 = vmatprep.subr.mxu0 0.0
      %479 = vmatpush1.msra.mxu0 %v282
      %480 = vmatprep.subr.mxu0 0.0
      %481 = vmatpush1.msra.mxu0 %v281
      %482 = vmatprep.subr.mxu0 0.0
      %483 = vmatpush1.msra.mxu0 %v280
      %484 = vmatprep.subr.mxu0 0.0
      %485 = vmatpush1.msra.mxu0 %v279
      %486 = vmatprep.subr.mxu0 0.0
      %487 = vmatpush1.msra.mxu0 %v278
      %488 = vmatprep.subr.mxu0 0.0
      %489 = vmatpush2.msra.mxu0 %v309
      %490 = vmatprep.subr.mxu0 0.0
      %491 = vmatpush2.msra.mxu0 %v308
      %492 = vmatprep.subr.mxu0 0.0
      %493 = vmatpush2.msra.mxu0 %v307
      %494 = vmatprep.subr.mxu0 0.0
      %495 = vmatpush2.msra.mxu0 %v306
      %496 = vmatprep.subr.mxu0 0.0
      %497 = vmatpush2.msra.mxu0 %v305
      %498 = vmatprep.subr.mxu0 0.0
      %499 = vmatpush2.msra.mxu0 %v304
      %500 = vmatprep.subr.mxu0 0.0
      %501 = vmatpush2.msra.mxu0 %v303
      %502 = vmatprep.subr.mxu0 0.0
      %503 = vmatpush2.msra.mxu0 %v302
      %504 = vmatprep.subr.mxu0 0.0
      %505 = vmatpush2.msra.mxu0 %v301
      %506 = vmatprep.subr.mxu0 0.0
      %507 = vmatpush2.msra.mxu0 %v300
      %508 = vmatprep.subr.mxu0 0.0
      %509 = vmatpush2.msra.mxu0 %v299
      %510 = vmatprep.subr.mxu0 0.0
      %511 = vmatpush2.msra.mxu0 %v298
      %512 = vmatprep.subr.mxu0 0.0
      %513 = vmatpush2.msra.mxu0 %v297
      %514 = vmatprep.subr.mxu0 0.0
      %515 = vmatpush2.msra.mxu0 %v296
      %516 = vmatprep.subr.mxu0 0.0
      %517 = vmatpush2.msra.mxu0 %v295
      %518 = vmatprep.subr.mxu0 0.0
      %519 = vmatpush2.msra.mxu0 %v294
      %520 = vmatprep.mubr.f32.mxu0 %v233
      %521 = vmatmul.mubr.f32.gmra.mxu0 %v232
      %v522 = vpop.f32.mrf.mxu0
      %v523 = vadd.f32 %v448, %v522
      %v524 = vpop.f32.mrf.mxu0
      %525 = vmatprep.mubr.f32.mxu0 %v241
      %526 = vmatmul.mubr.f32.gmra.mxu0 %v240
      %v527 = vpop.f32.mrf.mxu0
      %v528 = vadd.f32 %v453, %v527
      %v529 = vpop.f32.mrf.mxu0
      %530 = vdwg.mxu0
      %531 = vmatprep.subr.mxu0 0.0
      %532 = vmatpush1.msra.mxu0 %v325
      %533 = vmatprep.subr.mxu0 0.0
      %534 = vmatpush1.msra.mxu0 %v324
      %535 = vmatprep.subr.mxu0 0.0
      %536 = vmatpush1.msra.mxu0 %v323
      %537 = vmatprep.subr.mxu0 0.0
      %538 = vmatpush1.msra.mxu0 %v322
      %539 = vmatprep.subr.mxu0 0.0
      %540 = vmatpush1.msra.mxu0 %v321
      %541 = vmatprep.subr.mxu0 0.0
      %542 = vmatpush1.msra.mxu0 %v320
      %543 = vmatprep.subr.mxu0 0.0
      %544 = vmatpush1.msra.mxu0 %v319
      %545 = vmatprep.subr.mxu0 0.0
      %546 = vmatpush1.msra.mxu0 %v318
      %547 = vmatprep.subr.mxu0 0.0
      %548 = vmatpush1.msra.mxu0 %v317
      %549 = vmatprep.subr.mxu0 0.0
      %550 = vmatpush1.msra.mxu0 %v316
      %551 = vmatprep.subr.mxu0 0.0
      %552 = vmatpush1.msra.mxu0 %v315
      %553 = vmatprep.subr.mxu0 0.0
      %554 = vmatpush1.msra.mxu0 %v314
      %555 = vmatprep.subr.mxu0 0.0
      %556 = vmatpush1.msra.mxu0 %v313
      %557 = vmatprep.subr.mxu0 0.0
      %558 = vmatpush1.msra.mxu0 %v312
      %559 = vmatprep.subr.mxu0 0.0
      %560 = vmatpush1.msra.mxu0 %v311
      %561 = vmatprep.subr.mxu0 0.0
      %562 = vmatpush1.msra.mxu0 %v310
      %563 = vmatprep.subr.mxu0 0.0
      %564 = vmatpush2.msra.mxu0 %v341
      %565 = vmatprep.subr.mxu0 0.0
      %566 = vmatpush2.msra.mxu0 %v340
      %567 = vmatprep.subr.mxu0 0.0
      %568 = vmatpush2.msra.mxu0 %v339
      %569 = vmatprep.subr.mxu0 0.0
      %570 = vmatpush2.msra.mxu0 %v338
      %571 = vmatprep.subr.mxu0 0.0
      %572 = vmatpush2.msra.mxu0 %v337
      %573 = vmatprep.subr.mxu0 0.0
      %574 = vmatpush2.msra.mxu0 %v336
      %575 = vmatprep.subr.mxu0 0.0
      %576 = vmatpush2.msra.mxu0 %v335
      %577 = vmatprep.subr.mxu0 0.0
      %578 = vmatpush2.msra.mxu0 %v334
      %579 = vmatprep.subr.mxu0 0.0
      %580 = vmatpush2.msra.mxu0 %v333
      %581 = vmatprep.subr.mxu0 0.0
      %582 = vmatpush2.msra.mxu0 %v332
      %583 = vmatprep.subr.mxu0 0.0
      %584 = vmatpush2.msra.mxu0 %v331
      %585 = vmatprep.subr.mxu0 0.0
      %586 = vmatpush2.msra.mxu0 %v330
      %587 = vmatprep.subr.mxu0 0.0
      %588 = vmatpush2.msra.mxu0 %v329
      %589 = vmatprep.subr.mxu0 0.0
      %590 = vmatpush2.msra.mxu0 %v328
      %591 = vmatprep.subr.mxu0 0.0
      %592 = vmatpush2.msra.mxu0 %v327
      %593 = vmatprep.subr.mxu0 0.0
      %594 = vmatpush2.msra.mxu0 %v326
      %595 = vmatprep.mubr.f32.mxu0 %v235
      %596 = vmatmul.mubr.f32.gmra.mxu0 %v234
      %v597 = vpop.f32.mrf.mxu0
      %v598 = vadd.f32 %v523, %v597
      %v599 = vpop.f32.mrf.mxu0
      %600 = vmatprep.mubr.f32.mxu0 %v243
      %601 = vmatmul.mubr.f32.gmra.mxu0 %v242
      %v602 = vpop.f32.mrf.mxu0
      %v603 = vadd.f32 %v528, %v602
      %v604 = vpop.f32.mrf.mxu0
      %605 = vdwg.mxu0
      %606 = vmatprep.subr.mxu0 0.0
      %607 = vmatpush1.msra.mxu0 %v357
      %608 = vmatprep.subr.mxu0 0.0
      %609 = vmatpush1.msra.mxu0 %v356
      %610 = vmatprep.subr.mxu0 0.0
      %611 = vmatpush1.msra.mxu0 %v355
      %612 = vmatprep.subr.mxu0 0.0
      %613 = vmatpush1.msra.mxu0 %v354
      %614 = vmatprep.subr.mxu0 0.0
      %615 = vmatpush1.msra.mxu0 %v353
      %616 = vmatprep.subr.mxu0 0.0
      %617 = vmatpush1.msra.mxu0 %v352
      %618 = vmatprep.subr.mxu0 0.0
      %619 = vmatpush1.msra.mxu0 %v351
      %620 = vmatprep.subr.mxu0 0.0
      %621 = vmatpush1.msra.mxu0 %v350
      %622 = vmatprep.subr.mxu0 0.0
      %623 = vmatpush1.msra.mxu0 %v349
      %624 = vmatprep.subr.mxu0 0.0
      %625 = vmatpush1.msra.mxu0 %v348
      %626 = vmatprep.subr.mxu0 0.0
      %627 = vmatpush1.msra.mxu0 %v347
      %628 = vmatprep.subr.mxu0 0.0
      %629 = vmatpush1.msra.mxu0 %v346
      %630 = vmatprep.subr.mxu0 0.0
      %631 = vmatpush1.msra.mxu0 %v345
      %632 = vmatprep.subr.mxu0 0.0
      %633 = vmatpush1.msra.mxu0 %v344
      %634 = vmatprep.subr.mxu0 0.0
      %635 = vmatpush1.msra.mxu0 %v343
      %636 = vmatprep.subr.mxu0 0.0
      %637 = vmatpush1.msra.mxu0 %v342
      %638 = vmatprep.subr.mxu0 0.0
      %639 = vmatpush2.msra.mxu0 %v373
      %640 = vmatprep.subr.mxu0 0.0
      %641 = vmatpush2.msra.mxu0 %v372
      %642 = vmatprep.subr.mxu0 0.0
      %643 = vmatpush2.msra.mxu0 %v371
      %644 = vmatprep.subr.mxu0 0.0
      %645 = vmatpush2.msra.mxu0 %v370
      %646 = vmatprep.subr.mxu0 0.0
      %647 = vmatpush2.msra.mxu0 %v369
      %648 = vmatprep.subr.mxu0 0.0
      %649 = vmatpush2.msra.mxu0 %v368
      %650 = vmatprep.subr.mxu0 0.0
      %651 = vmatpush2.msra.mxu0 %v367
      %652 = vmatprep.subr.mxu0 0.0
      %653 = vmatpush2.msra.mxu0 %v366
      %654 = vmatprep.subr.mxu0 0.0
      %655 = vmatpush2.msra.mxu0 %v365
      %656 = vmatprep.subr.mxu0 0.0
      %657 = vmatpush2.msra.mxu0 %v364
      %658 = vmatprep.subr.mxu0 0.0
      %659 = vmatpush2.msra.mxu0 %v363
      %660 = vmatprep.subr.mxu0 0.0
      %661 = vmatpush2.msra.mxu0 %v362
      %662 = vmatprep.subr.mxu0 0.0
      %663 = vmatpush2.msra.mxu0 %v361
      %664 = vmatprep.subr.mxu0 0.0
      %665 = vmatpush2.msra.mxu0 %v360
      %666 = vmatprep.subr.mxu0 0.0
      %667 = vmatpush2.msra.mxu0 %v359
      %668 = vmatprep.subr.mxu0 0.0
      %669 = vmatpush2.msra.mxu0 %v358
      %670 = vmatprep.mubr.f32.mxu0 %v237
      %671 = vmatmul.mubr.f32.gmra.mxu0 %v236
      %v672 = vpop.f32.mrf.mxu0
      %v673 = vadd.f32 %v598, %v672
      %v674 = vpop.f32.mrf.mxu0
      %675 = vmatprep.mubr.f32.mxu0 %v245
      %676 = vmatmul.mubr.f32.gmra.mxu0 %v244
      %v677 = vpop.f32.mrf.mxu0
      %v678 = vadd.f32 %v603, %v677
      %v679 = vpop.f32.mrf.mxu0
      %680 = vdwg.mxu0
      %vm681 = vcmask 7168
      %682 = vst.msk [vmem:[%s228] sm:$0xff] %vm681, %v673
      %683 = vst.msk [vmem:[%s228 + $0x8] sm:$0xff] %vm681, %v678
      %s684 = smul.u32 2, %s20
      %p685 = scmp.lt.s32.totalorder %s684, 3
      %s686 = scalar_select %p685, %s684, 3
      %p687 = scmp.lt.s32.totalorder %s21, 0
      %s688 = scalar_select %p687, %s21, 0
      %s689 = sadd.s32 %s688, %s686
      %s690 = smul.addr %s689, 8
      %s691 = scalar_lea.vmem %s3, %s690
      // Predicated region
      $region33: #{tpu_custom_call.1} parent=31 // pred_check
        %p692 = pneg %p126
      $region34: #{tpu_custom_call.1} parent=31 // pred_check_branch
        %694 = sbr.rel (%p692) target = $region36
      $region35: #{tpu_custom_call.1} parent=31 // pred_region
        %s695 = smul.u32 2, %s20
      $region36: #{tpu_custom_call.1} parent=31 // pred_fallthru
        _
    $region32: #{tpu_custom_call.1} parent=5 // pred_fallthru
      _
    %p696 = scmp.le.s32.totalorder 2, %s11
    // Predicated region
    $region37: #{tpu_custom_call.1} parent=5 // pred_check
      %p697 = pneg %p696
    $region38: #{tpu_custom_call.1} parent=5 // pred_check_branch
      %699 = sbr.rel (%p697) target = $region40
    $region39: #{tpu_custom_call.1} parent=5 // pred_region
      %s700 = ssub.s32 %s11, 2
      // Predicated region
      $region41: #{tpu_custom_call.1} parent=39 // pred_check
        %p701 = pneg %p132
      $region42: #{tpu_custom_call.1} parent=39 // pred_check_branch
        %703 = sbr.rel (%p701) target = $region44
      $region43: #{tpu_custom_call.1} parent=39 // pred_region
        %s704 = smul.u32 2, %s22
        %p705 = scmp.lt.s32.totalorder %s704, 3
        %s706 = scalar_select %p705, %s704, 3
        %p707 = scmp.lt.s32.totalorder %s23, 0
        %s708 = scalar_select %p707, %s23, 0
        %s709 = sadd.s32 %s708, %s706
        %s710 = smul.addr %s709, 8
        %s711 = scalar_lea.vmem %s3, %s710
      $region44: #{tpu_custom_call.1} parent=39 // pred_fallthru
        _
    $region40: #{tpu_custom_call.1} parent=5 // pred_fallthru
      _
  $region6: #{tpu_custom_call.1} parent=0 // loop_footer
    %s15 = sadd.s32 1, %s11
  $region7: #{tpu_custom_call.1} parent=0 // loop_footer_branch
    %10 = sbr.rel target = $region3
  $region8: #{tpu_custom_call.1} parent=0 // loop_exit
    _

</llo_original>
